<compile_context>
chip_gen: v6e
topology: v6e:2x2x1
jax: 0.10.0
libtpu: 0.0.40
codegen_flags: <defaults>
</compile_context>

<pallas_src>
import math

import jax
import jax.numpy as jnp
from jax.experimental import pallas as pl
from jax.experimental.pallas import tpu as pltpu


def multi_emb_kernel(x_ref, t_hi_ref, t_lo_ref, out_ref):
    ids = x_ref[...]                                   # (tile_n, K) int32, pre-offset
    tile_n = out_ref.shape[0]
    v_pad = t_hi_ref.shape[0]
    num_keys = ids.shape[1]

    # Single hoisted iota; OR-accumulate a boolean one-hot, cast once to bf16.
    iota = jax.lax.broadcasted_iota(jnp.int32, (tile_n, v_pad), 1)
    mask = iota == ids[:, 0:1]
    for k in range(1, num_keys):
        mask = mask | (iota == ids[:, k:k + 1])
    onehot = mask.astype(jnp.bfloat16)                 # 0/1 exact in bf16

    # Two bf16 MXU passes (hi + lo table components), f32 accumulation.
    acc = jnp.dot(onehot, t_hi_ref[...], preferred_element_type=jnp.float32)
    acc = acc + jnp.dot(onehot, t_lo_ref[...], preferred_element_type=jnp.float32)
    out_ref[...] = acc


def build_multi_embedding_params(tables):
    """Build the fused block-diagonal hi/lo tables once per parameter set."""
    vocabs = [int(t.shape[0]) for t in tables]
    dims = [int(t.shape[1]) for t in tables]
    d_total = sum(dims)
    V = sum(vocabs)
    V_pad = ((V + 127) // 128) * 128                   # lane-align the one-hot/K dim
    d_pad = ((d_total + 127) // 128) * 128             # lane-dense output stores

    combined = jnp.zeros((V_pad, d_pad), jnp.float32)
    offsets = []
    r = c = 0
    for t, v, d in zip(tables, vocabs, dims):
        offsets.append(r)
        combined = combined.at[r:r + v, c:c + d].set(
            t.astype(jnp.float32) * jnp.float32(math.sqrt(d)))
        r += v
        c += d

    t_hi = combined.astype(jnp.bfloat16)
    t_lo = (combined - t_hi.astype(jnp.float32)).astype(jnp.bfloat16)

    return {
        "t_hi": t_hi,
        "t_lo": t_lo,
        "offsets": jnp.asarray(offsets, dtype=jnp.int32),
        "vocab_sizes": jnp.asarray(vocabs, dtype=jnp.int32),
        "num_keys": len(tables),
        "d_total": d_total,
        "d_pad": d_pad,
        "V_pad": V_pad,
    }


def multi_embedding(x, params, *, tile_n=1024):
    """x: (B, S, K) int32 ids; params: output of build_multi_embedding_params."""
    B, S, K = x.shape
    assert K == params["num_keys"]
    d_total, d_pad, V_pad = params["d_total"], params["d_pad"], params["V_pad"]

    N = B * S
    # Clamp each key's ids into range, then add cumulative vocab offsets so the
    # kernel needs only one iota range (no cross-key row-band bleeding).
    x_flat = x.reshape(N, K).astype(jnp.int32)
    x_flat = jnp.clip(x_flat, 0, params["vocab_sizes"][None, :] - 1)
    x_flat = x_flat + params["offsets"][None, :]

    # Tile sizing: big tiles for throughput, but (a) never bigger than padded N
    # and (b) keep >= 2 grid steps when there's enough work so the "parallel"
    # axis can be sharded across v7x's two TensorCores.
    n_pad8 = ((N + 7) // 8) * 8
    tile_n_eff = min(tile_n, n_pad8)
    if n_pad8 >= 16:
        half = ((((n_pad8 + 1) // 2) + 7) // 8) * 8
        tile_n_eff = min(tile_n_eff, half)
    tile_n_eff = ((tile_n_eff + 7) // 8) * 8
    N_pad = ((N + tile_n_eff - 1) // tile_n_eff) * tile_n_eff
    if N_pad != N:
        pad_ids = jnp.broadcast_to(params["offsets"][None, :],
                                   (N_pad - N, K)).astype(jnp.int32)
        x_flat = jnp.concatenate([x_flat, pad_ids], axis=0)

    grid = (N_pad // tile_n_eff,)

    out = pl.pallas_call(
        multi_emb_kernel,
        out_shape=jax.ShapeDtypeStruct((N_pad, d_pad), jnp.float32),
        grid=grid,
        in_specs=[
            pl.BlockSpec((tile_n_eff, K), lambda i: (i, 0)),
            pl.BlockSpec((V_pad, d_pad), lambda i: (0, 0)),   # resident hi table
            pl.BlockSpec((V_pad, d_pad), lambda i: (0, 0)),   # resident lo table
        ],
        out_specs=pl.BlockSpec((tile_n_eff, d_pad), lambda i: (i, 0)),
        compiler_params=pltpu.CompilerParams(
            dimension_semantics=("parallel",)),
    )(x_flat, params["t_hi"], params["t_lo"])

    # Drop row padding and the lane-padding columns in one slice + reshape.
    return out[:N, :d_total].reshape(B, S, d_total)


def reference_multi_embedding(x, tables):
    outs = []
    for k, t in enumerate(tables):
        d = t.shape[1]
        outs.append(jnp.take(t, x[..., k], axis=0) * math.sqrt(d))
    return jnp.concatenate(outs, axis=-1)


if __name__ == "__main__":
    # CP-style vocab sizes / embedding dims (small, deterministic).
    n_tokens = {"tempo_key": 56, "chord_key": 135, "barbeat_key": 18,
                "type_key": 4, "pitch_key": 87, "duration_key": 18,
                "velocity_key": 25}
    d_emb = {"tempo_key": 16, "chord_key": 32, "barbeat_key": 8,
             "type_key": 8, "pitch_key": 64, "duration_key": 16,
             "velocity_key": 16}

    key = jax.random.PRNGKey(0)
    keys = jax.random.split(key, len(n_tokens) + 1)

    # nn.Embedding default init: N(0, 1).
    tables = []
    for i, name in enumerate(n_tokens):
        tables.append(jax.random.normal(
            keys[i], (n_tokens[name], d_emb[name]), dtype=jnp.float32))

    # Input token ids: (batch=2, seq=8, 7), each column within its vocab.
    B, S = 2, 8
    id_keys = jax.random.split(keys[-1], len(n_tokens))
    cols = [jax.random.randint(id_keys[i], (B, S, 1), 0, n_tokens[name],
                               dtype=jnp.int32)
            for i, name in enumerate(n_tokens)]
    x = jnp.concatenate(cols, axis=-1)

    # Build the fused tables once (hoisted out of the per-call path).
    params = build_multi_embedding_params(tables)

    out = multi_embedding(x, params)
    out = jax.block_until_ready(out)

    ref = reference_multi_embedding(x, tables)
    assert out.shape == (B, S, sum(d_emb.values()))
    assert jnp.allclose(out, ref, atol=1e-5, rtol=1e-5)

    print("KERNEL_OK")
</pallas_src>

<mosaic_0001>
module attributes {stable_mosaic.version = 11 : i64} {
  func.func @multi_emb_kernel(%arg0: i32, %arg1: memref<8x7xi32, #tpu.memory_space<vmem>>, %arg2: memref<384x256xbf16, #tpu.memory_space<vmem>>, %arg3: memref<384x256xbf16, #tpu.memory_space<vmem>>, %arg4: memref<8x256xf32, #tpu.memory_space<vmem>>) attributes {dimension_semantics = [#tpu.dimension_semantics<parallel>], iteration_bounds = array<i64: 2>, scalar_prefetch = 0 : i64, scratch_operands = 0 : i64, tpu.core_type = #tpu.core_type<tc>, window_params = [{transform_indices = @transform_0, window_bounds = array<i64: 8, 7>}, {pipeline_mode = #tpu.pipeline_mode<synchronous>, transform_indices = @transform_1, window_bounds = array<i64: 384, 256>}, {pipeline_mode = #tpu.pipeline_mode<synchronous>, transform_indices = @transform_2, window_bounds = array<i64: 384, 256>}, {transform_indices = @transform_3, window_bounds = array<i64: 8, 256>}]} {
    %c0 = arith.constant 0 : index
    %c0_0 = arith.constant 0 : index
    %0 = vector.load %arg1[%c0, %c0_0] : memref<8x7xi32, #tpu.memory_space<vmem>>, vector<8x7xi32>
    %1 = tpu.iota {dimensions = array<i32: 1>} : vector<8x384xi32>
    %2 = vector.extract_strided_slice %0 {offsets = [0, 0], sizes = [8, 1], strides = [1, 1]} : vector<8x7xi32> to vector<8x1xi32>
    %3 = vector.broadcast %2 : vector<8x1xi32> to vector<8x384xi32>
    %4 = arith.cmpi eq, %1, %3 : vector<8x384xi32>
    %5 = vector.extract_strided_slice %0 {offsets = [0, 1], sizes = [8, 1], strides = [1, 1]} : vector<8x7xi32> to vector<8x1xi32>
    %6 = vector.broadcast %5 : vector<8x1xi32> to vector<8x384xi32>
    %7 = arith.cmpi eq, %1, %6 : vector<8x384xi32>
    %8 = arith.ori %4, %7 : vector<8x384xi1>
    %9 = vector.extract_strided_slice %0 {offsets = [0, 2], sizes = [8, 1], strides = [1, 1]} : vector<8x7xi32> to vector<8x1xi32>
    %10 = vector.broadcast %9 : vector<8x1xi32> to vector<8x384xi32>
    %11 = arith.cmpi eq, %1, %10 : vector<8x384xi32>
    %12 = arith.ori %8, %11 : vector<8x384xi1>
    %13 = vector.extract_strided_slice %0 {offsets = [0, 3], sizes = [8, 1], strides = [1, 1]} : vector<8x7xi32> to vector<8x1xi32>
    %14 = vector.broadcast %13 : vector<8x1xi32> to vector<8x384xi32>
    %15 = arith.cmpi eq, %1, %14 : vector<8x384xi32>
    %16 = arith.ori %12, %15 : vector<8x384xi1>
    %17 = vector.extract_strided_slice %0 {offsets = [0, 4], sizes = [8, 1], strides = [1, 1]} : vector<8x7xi32> to vector<8x1xi32>
    %18 = vector.broadcast %17 : vector<8x1xi32> to vector<8x384xi32>
    %19 = arith.cmpi eq, %1, %18 : vector<8x384xi32>
    %20 = arith.ori %16, %19 : vector<8x384xi1>
    %21 = vector.extract_strided_slice %0 {offsets = [0, 5], sizes = [8, 1], strides = [1, 1]} : vector<8x7xi32> to vector<8x1xi32>
    %22 = vector.broadcast %21 : vector<8x1xi32> to vector<8x384xi32>
    %23 = arith.cmpi eq, %1, %22 : vector<8x384xi32>
    %24 = arith.ori %20, %23 : vector<8x384xi1>
    %25 = vector.extract_strided_slice %0 {offsets = [0, 6], sizes = [8, 1], strides = [1, 1]} : vector<8x7xi32> to vector<8x1xi32>
    %26 = vector.broadcast %25 : vector<8x1xi32> to vector<8x384xi32>
    %27 = arith.cmpi eq, %1, %26 : vector<8x384xi32>
    %28 = arith.ori %24, %27 : vector<8x384xi1>
    %29 = arith.extui %28 : vector<8x384xi1> to vector<8x384xi32>
    %30 = arith.sitofp %29 : vector<8x384xi32> to vector<8x384xf32>
    %31 = arith.truncf %30 : vector<8x384xf32> to vector<8x384xbf16>
    %c0_1 = arith.constant 0 : index
    %c0_2 = arith.constant 0 : index
    %32 = vector.load %arg2[%c0_1, %c0_2] : memref<384x256xbf16, #tpu.memory_space<vmem>>, vector<384x256xbf16>
    %cst = arith.constant dense<0.000000e+00> : vector<8x256xf32>
    %33 = tpu.matmul %31, %32, %cst {dimension_numbers = #tpu.dot_dimension_numbers<[1], [0], [0], [1], [0, 0, 1, 1], [], []>} : vector<8x384xbf16>, vector<384x256xbf16>, vector<8x256xf32> -> vector<8x256xf32>
    %c0_3 = arith.constant 0 : index
    %c0_4 = arith.constant 0 : index
    %34 = vector.load %arg3[%c0_3, %c0_4] : memref<384x256xbf16, #tpu.memory_space<vmem>>, vector<384x256xbf16>
    %cst_5 = arith.constant dense<0.000000e+00> : vector<8x256xf32>
    %35 = tpu.matmul %31, %34, %cst_5 {dimension_numbers = #tpu.dot_dimension_numbers<[1], [0], [0], [1], [0, 0, 1, 1], [], []>} : vector<8x384xbf16>, vector<384x256xbf16>, vector<8x256xf32> -> vector<8x256xf32>
    %36 = arith.addf %33, %35 : vector<8x256xf32>
    %c0_6 = arith.constant 0 : index
    %c0_7 = arith.constant 0 : index
    %37 = vector.load %arg4[%c0_6, %c0_7] : memref<8x256xf32, #tpu.memory_space<vmem>>, vector<8x256xf32>
    tpu.vector_store %arg4[%c0_6, %c0_7], %36 {strides = array<i32>} : memref<8x256xf32, #tpu.memory_space<vmem>>, vector<8x256xf32>,
    return
  }
  func.func @transform_0(%arg0: i32) -> (i32, i32) {
    %c0_i32 = arith.constant 0 : i32
    %c0_i32_0 = arith.constant 0 : i32
    return %arg0, %c0_i32 : i32, i32
  }
  func.func @transform_1(%arg0: i32) -> (i32, i32) {
    %c0_i32 = arith.constant 0 : i32
    %c0_i32_0 = arith.constant 0 : i32
    %c0_i32_1 = arith.constant 0 : i32
    return %c0_i32, %c0_i32_0 : i32, i32
  }
  func.func @transform_2(%arg0: i32) -> (i32, i32) {
    %c0_i32 = arith.constant 0 : i32
    %c0_i32_0 = arith.constant 0 : i32
    %c0_i32_1 = arith.constant 0 : i32
    return %c0_i32, %c0_i32_0 : i32, i32
  }
  func.func @transform_3(%arg0: i32) -> (i32, i32) {
    %c0_i32 = arith.constant 0 : i32
    %c0_i32_0 = arith.constant 0 : i32
    return %arg0, %c0_i32 : i32, i32
  }
}

</mosaic_0001>

<llo_original>
// kernel: tpu_custom_call.1
$region0: #{tpu_custom_call.1}
  #allocation0 [shape = 'u32[]', space=smem, size = 0x4, offset = 0x4, fixed_abs, tag = 'smem constant byte address 0x4 - core index']
  #allocation1 [shape = 'u32[144,128]{1,0:T(1,128)}', space=vmem, size = 0x12000, scoped, tag = 'internal scratch']
  %s0 = inlined_call_operand.vmem [shape: s32[16,7], index: 0, kind: input, shape index: {}]
  %s1 = inlined_call_operand.hbm [shape: bf16[384,256], index: 1, kind: input, shape index: {}]
  %s2 = inlined_call_operand.hbm [shape: bf16[384,256], index: 2, kind: input, shape index: {}]
  %s3 = inlined_call_operand.hbm [shape: f32[16,256], index: 3, kind: output, shape index: {}]
  %s4 = sld [smem:[#allocation0]]
  $region53: #{tpu_custom_call.1} parent=0
    _
  %s6 = ssub.s32 1, %s4
  %s7 = scalar_select 0, %s6, %s4
  $region1: #{tpu_custom_call.1} parent=0
    #allocation2 [shape = 'u8[196608]{0}', space=vmem, size = 0x30000, scoped, tag = 'input window, operand 1, single buffered']
    #allocation3 [shape = 's32[2]{0}', space=sflag, size = 0x8, scoped, tag = 'scoped memory for tpu_custom_call.1']
    #allocation4 [shape = 's32[2]{0}', space=sflag, size = 0x8, scoped, tag = 'scoped memory for tpu_custom_call.1']
    #allocation5 [shape = 'u8[196608]{0}', space=vmem, size = 0x30000, scoped, tag = 'input window, operand 2, single buffered']
    #allocation6 [shape = 's32[1]{0}', space=sflag, size = 0x4, scoped, tag = 'scoped memory for tpu_custom_call.1']
    #allocation7 [shape = 'u8[16384]{0}', space=vmem, size = 0x4000, scoped, tag = 'output window, operand 0']
    %8 = vsyncpa [#allocation3], 0
    %9 = vsyncpa [#allocation6], 0
    %10 = vsyncpa [#allocation4], 0
    %s11 = scalar_lea.sflag [#allocation4], 1
    %12 = vsyncpa %s11, 0
    loop: start=0, step=1, limit=4
    $region2: #{tpu_custom_call.1} parent=1 // loop_pre_header
      _
    $region3: #{tpu_custom_call.1} parent=1 // loop_header
      %s14 = sphi 0, %s18
      %p15 = scmp.ge.s32.totalorder %s14, 4
      %s24 = sphi 0, %s26
      %s27 = sphi 0, %s24
      %s28 = sphi 0, %s27
      %s44 = sphi 0, %s28
      %s48 = sphi 0, %s48
      %s50 = sphi 0, %s48
      %s51 = sphi 0, %s50
      %s65 = sphi 0, %s51
      %s69 = sphi 0, %s69
      %s71 = sphi 0, %s69
      %s72 = sphi 0, %s71
      %s86 = sphi 0, %s72
      %s92 = sphi 0, %s94
      %s95 = sphi 0, %s92
      %s96 = sphi 0, %s95
      %s112 = sphi 0, %s96
    $region4: #{tpu_custom_call.1} parent=1 // loop_header_branch
      %17 = sbr.rel (%p15) target = $region8
    $region5: #{tpu_custom_call.1} parent=1 // loop_body
      %s19 = ssub.s32 %s14, 1
      %s20 = ssub.s32 %s14, 2
      %s21 = sadd.s32 %s14, 1
      %s22 = ssub.s32 %s14, %s21
      %p23 = scmp.eq.s32.totalorder %s22, 0
      %s25 = sadd.s32 %s24, 1
      %s26 = scalar_select %p23, %s24, %s25
      %p29 = pneg %p23
      %p30 = scmp.eq.s32.totalorder %s14, 1
      %p31 = por %p29, %p30
      %p32 = scmp.ne.s32.totalorder %s24, %s27
      %p33 = scmp.eq.s32.totalorder %s14, 0
      %p34 = por %p32, %p33
      %p35 = scmp.ne.s32.totalorder %s24, %s27
      %p36 = scmp.eq.s32.totalorder %s19, 1
      %p37 = por %p35, %p36
      %p38 = scmp.ne.s32.totalorder %s27, %s28
      %p39 = scmp.eq.s32.totalorder %s19, 0
      %p40 = por %p38, %p39
      %p41 = scmp.ne.s32.totalorder %s27, %s28
      %p42 = scmp.eq.s32.totalorder %s20, 1
      %p43 = por %p41, %p42
      %p45 = scmp.ne.s32.totalorder %s28, %s44
      %p46 = scmp.eq.s32.totalorder %s20, 0
      %p47 = por %p45, %p46
      %s49 = sadd.s32 %s48, 1
      %p52 = scmp.eq.s32.totalorder %s14, 1
      %p53 = scmp.ne.s32.totalorder %s48, %s50
      %p54 = scmp.eq.s32.totalorder %s14, 0
      %p55 = por %p53, %p54
      %p56 = scmp.ne.s32.totalorder %s48, %s50
      %p57 = scmp.eq.s32.totalorder %s19, 1
      %p58 = por %p56, %p57
      %p59 = scmp.ne.s32.totalorder %s50, %s51
      %p60 = scmp.eq.s32.totalorder %s19, 0
      %p61 = por %p59, %p60
      %p62 = scmp.ne.s32.totalorder %s50, %s51
      %p63 = scmp.eq.s32.totalorder %s20, 1
      %p64 = por %p62, %p63
      %p66 = scmp.ne.s32.totalorder %s51, %s65
      %p67 = scmp.eq.s32.totalorder %s20, 0
      %p68 = por %p66, %p67
      %s70 = sadd.s32 %s69, 1
      %p73 = scmp.eq.s32.totalorder %s14, 1
      %p74 = scmp.ne.s32.totalorder %s69, %s71
      %p75 = scmp.eq.s32.totalorder %s14, 0
      %p76 = por %p74, %p75
      %p77 = scmp.ne.s32.totalorder %s69, %s71
      %p78 = scmp.eq.s32.totalorder %s19, 1
      %p79 = por %p77, %p78
      %p80 = scmp.ne.s32.totalorder %s71, %s72
      %p81 = scmp.eq.s32.totalorder %s19, 0
      %p82 = por %p80, %p81
      %p83 = scmp.ne.s32.totalorder %s71, %s72
      %p84 = scmp.eq.s32.totalorder %s20, 1
      %p85 = por %p83, %p84
      %p87 = scmp.ne.s32.totalorder %s72, %s86
      %p88 = scmp.eq.s32.totalorder %s20, 0
      %p89 = por %p87, %p88
      %s90 = ssub.s32 %s14, %s21
      %p91 = scmp.eq.s32.totalorder %s90, 0
      %s93 = sadd.s32 %s92, 1
      %s94 = scalar_select %p91, %s92, %s93
      %p97 = pneg %p91
      %p98 = scmp.eq.s32.totalorder %s14, 1
      %p99 = por %p97, %p98
      %p100 = scmp.ne.s32.totalorder %s92, %s95
      %p101 = scmp.eq.s32.totalorder %s14, 0
      %p102 = por %p100, %p101
      %p103 = scmp.ne.s32.totalorder %s92, %s95
      %p104 = scmp.eq.s32.totalorder %s19, 1
      %p105 = por %p103, %p104
      %p106 = scmp.ne.s32.totalorder %s95, %s96
      %p107 = scmp.eq.s32.totalorder %s19, 0
      %p108 = por %p106, %p107
      %p109 = scmp.ne.s32.totalorder %s95, %s96
      %p110 = scmp.eq.s32.totalorder %s20, 1
      %p111 = por %p109, %p110
      %p113 = scmp.ne.s32.totalorder %s96, %s112
      %p114 = scmp.eq.s32.totalorder %s20, 0
      %p115 = por %p113, %p114
      %p116 = scmp.le.s32.totalorder 1, %s14
      %p117 = scmp.lt.s32.totalorder %s14, 3
      %p118 = pnand %p116, %p117
      %p119 = pneg %p118
      // Predicated region
      $region9: #{tpu_custom_call.1} parent=5 // pred_check
        _
      $region10: #{tpu_custom_call.1} parent=5 // pred_check_branch
        %121 = sbr.rel (%p118) target = $region12
      $region11: #{tpu_custom_call.1} parent=5 // pred_region
        %s122 = ssub.s32 %s14, 1
        // Predicated region
        $region13: #{tpu_custom_call.1} parent=11 // pred_check
          %p123 = pneg %p61
        $region14: #{tpu_custom_call.1} parent=11 // pred_check_branch
          %125 = sbr.rel (%p123) target = $region16
        $region15: #{tpu_custom_call.1} parent=11 // pred_region
          %s127 = ssub.s32 6144, 6144
          %128 = vsyncadd [#allocation3], %s127
          %s129 = sshll.u32 [#allocation2], 4
          %s130 = int_to_ptr.vmem [resolvable:$true] %s129
          %135 = dma.hbm_to_vmem [thread:$0]  %s1, 6144, %s130, [#allocation3], 128, 128, 8
        $region16: #{tpu_custom_call.1} parent=11 // pred_fallthru
          _
        // Predicated region
        $region17: #{tpu_custom_call.1} parent=11 // pred_check
          %p136 = pneg %p82
        $region18: #{tpu_custom_call.1} parent=11 // pred_check_branch
          %138 = sbr.rel (%p136) target = $region20
        $region19: #{tpu_custom_call.1} parent=11 // pred_region
          %s140 = ssub.s32 6144, 6144
          %141 = vsyncadd [#allocation6], %s140
          %s142 = sshll.u32 [#allocation5], 4
          %s143 = int_to_ptr.vmem [resolvable:$true] %s142
          %148 = dma.hbm_to_vmem [thread:$0]  %s2, 6144, %s143, [#allocation6], 128, 128, 8
        $region20: #{tpu_custom_call.1} parent=11 // pred_fallthru
          _
      $region12: #{tpu_custom_call.1} parent=5 // pred_fallthru
        _
      %p149 = scmp.lt.s32.totalorder %s14, 2
      // Predicated region
      $region21: #{tpu_custom_call.1} parent=5 // pred_check
        %p150 = pneg %p149
      $region22: #{tpu_custom_call.1} parent=5 // pred_check_branch
        %152 = sbr.rel (%p150) target = $region24
      $region23: #{tpu_custom_call.1} parent=5 // pred_region
        // Predicated region
        $region25: #{tpu_custom_call.1} parent=23 // pred_check
          %p153 = pneg %p34
        $region26: #{tpu_custom_call.1} parent=23 // pred_check_branch
          %155 = sbr.rel (%p153) target = $region28
        $region27: #{tpu_custom_call.1} parent=23 // pred_region
          %p156 = scmp.lt.s32.totalorder %s14, 1
          %s157 = scalar_select %p156, %s14, 1
          %s158 = smul.addr %s157, 8
          %s159 = scalar_lea.vmem %s0, %s158
        $region28: #{tpu_custom_call.1} parent=23 // pred_fallthru
          _
      $region24: #{tpu_custom_call.1} parent=5 // pred_fallthru
        _
      %p160 = scmp.le.s32.totalorder 1, %s14
      %p161 = scmp.lt.s32.totalorder %s14, 3
      %p162 = pnand %p160, %p161
      %p163 = pneg %p162
      // Predicated region
      $region29: #{tpu_custom_call.1} parent=5 // pred_check
        _
      $region30: #{tpu_custom_call.1} parent=5 // pred_check_branch
        %165 = sbr.rel (%p162) target = $region32
      $region31: #{tpu_custom_call.1} parent=5 // pred_region
        %s166 = ssub.s32 %s14, 1
        // Predicated region
        $region33: #{tpu_custom_call.1} parent=31 // pred_check
          %p167 = pneg %p61
        $region34: #{tpu_custom_call.1} parent=31 // pred_check_branch
          %169 = sbr.rel (%p167) target = $region36
        $region35: #{tpu_custom_call.1} parent=31 // pred_region
          %170 = dma.done [#allocation3], 6144
        $region36: #{tpu_custom_call.1} parent=31 // pred_fallthru
          _
        // Predicated region
        $region37: #{tpu_custom_call.1} parent=31 // pred_check
          %p171 = pneg %p82
        $region38: #{tpu_custom_call.1} parent=31 // pred_check_branch
          %173 = sbr.rel (%p171) target = $region40
        $region39: #{tpu_custom_call.1} parent=31 // pred_region
          %174 = dma.done [#allocation6], 6144
        $region40: #{tpu_custom_call.1} parent=31 // pred_fallthru
          _
        %p175 = scmp.lt.s32.totalorder %s19, 1
        %s176 = scalar_select %p175, %s19, 1
        %s177 = smul.addr %s176, 8
        %s178 = scalar_lea.vmem %s0, %s177
        %p179 = pneg %p40
        %p180 = pneg %p37
        %p181 = pneg %p61
        %p182 = pneg %p58
        %p183 = pneg %p82
        %p184 = pneg %p79
        %p185 = pneg %p108
        %p186 = pneg %p105
        %s187 = sand.u32 %s95, 1
        %s188 = scalar_lea.sflag [#allocation4], %s187
        %s189 = sand.u32 %s95, 1
        %s190 = smul.addr %s189, 16
        %s191 = scalar_lea.vmem [#allocation7], %s190
        %p192 = scmp.lt.s32.totalorder %s19, 1
        %s193 = scalar_select %p192, %s19, 1
        %s194 = smul.addr %s193, 8
        %s195 = scalar_lea.vmem %s0, %s194
        %v197 = vld [vmem:[%s195] sm:$0xff]
        %v198 = vlaneseq
        %v199 = vand.u32 %v198, 127
        %v200 = vadd.s32 %v199, 128
        %v201 = vadd.s32 %v199, 256
        %202 = vset.pattern.permute.xlu0 0
        %203 = vperm.xlu0 %202, %v197
        %v204 = vpop.permute.xlu0 %203
        %vm205 = vcmp.eq.s32.totalorder %v199, %v204
        %vm206 = vcmp.eq.s32.totalorder %v200, %v204
        %vm207 = vcmp.eq.s32.totalorder %v201, %v204
        %208 = vset.pattern.permute.xlu0 1
        %209 = vperm.xlu0 %208, %v197
        %v210 = vpop.permute.xlu0 %209
        %vm211 = vcmp.eq.s32.totalorder %v199, %v210
        %vm212 = vcmp.eq.s32.totalorder %v200, %v210
        %vm213 = vcmp.eq.s32.totalorder %v201, %v210
        %vm214 = vmor %vm205, %vm211
        %vm215 = vmor %vm206, %vm212
        %vm216 = vmor %vm207, %vm213
        %217 = vset.pattern.permute.xlu0 2
        %218 = vperm.xlu0 %217, %v197
        %v219 = vpop.permute.xlu0 %218
        %vm220 = vcmp.eq.s32.totalorder %v199, %v219
        %vm221 = vcmp.eq.s32.totalorder %v200, %v219
        %vm222 = vcmp.eq.s32.totalorder %v201, %v219
        %vm223 = vmor %vm214, %vm220
        %vm224 = vmor %vm215, %vm221
        %vm225 = vmor %vm216, %vm222
        %226 = vset.pattern.permute.xlu0 3
        %227 = vperm.xlu0 %226, %v197
        %v228 = vpop.permute.xlu0 %227
        %vm229 = vcmp.eq.s32.totalorder %v199, %v228
        %vm230 = vcmp.eq.s32.totalorder %v200, %v228
        %vm231 = vcmp.eq.s32.totalorder %v201, %v228
        %vm232 = vmor %vm223, %vm229
        %vm233 = vmor %vm224, %vm230
        %vm234 = vmor %vm225, %vm231
        %235 = vset.pattern.permute.xlu0 4
        %236 = vperm.xlu0 %235, %v197
        %v237 = vpop.permute.xlu0 %236
        %vm238 = vcmp.eq.s32.totalorder %v199, %v237
        %vm239 = vcmp.eq.s32.totalorder %v200, %v237
        %vm240 = vcmp.eq.s32.totalorder %v201, %v237
        %vm241 = vmor %vm232, %vm238
        %vm242 = vmor %vm233, %vm239
        %vm243 = vmor %vm234, %vm240
        %244 = vset.pattern.permute.xlu0 5
        %245 = vperm.xlu0 %244, %v197
        %v246 = vpop.permute.xlu0 %245
        %vm247 = vcmp.eq.s32.totalorder %v199, %v246
        %vm248 = vcmp.eq.s32.totalorder %v200, %v246
        %vm249 = vcmp.eq.s32.totalorder %v201, %v246
        %vm250 = vmor %vm241, %vm247
        %vm251 = vmor %vm242, %vm248
        %vm252 = vmor %vm243, %vm249
        %253 = vset.pattern.permute.xlu0 6
        %254 = vperm.xlu0 %253, %v197
        %v255 = vpop.permute.xlu0 %254
        %vm256 = vcmp.eq.s32.totalorder %v199, %v255
        %vm257 = vcmp.eq.s32.totalorder %v200, %v255
        %vm258 = vcmp.eq.s32.totalorder %v201, %v255
        %vm259 = vmor %vm250, %vm256
        %vm260 = vmor %vm251, %vm257
        %vm261 = vmor %vm252, %vm258
        %v262 = vsel %vm259, 1, 0
        %v263 = vsel %vm260, 1, 0
        %v264 = vsel %vm261, 1, 0
        %v265 = vcvt.s32.f32 %v262
        %v266 = vcvt.s32.f32 %v263
        %v267 = vcvt.s32.f32 %v264
        %v268 = vpack.c.bf16 %v265, %v265
        %v269 = vpack.c.bf16 %v266, %v266
        %v270 = vpack.c.bf16 %v267, %v267
        %v271 = vld [vmem:[#allocation2] sm:$0xff]
        %v272 = vld [vmem:[#allocation2 + $0x8] sm:$0xff]
        %v273 = vld [vmem:[#allocation2 + $0x10] sm:$0xff]
        %v274 = vld [vmem:[#allocation2 + $0x18] sm:$0xff]
        %v275 = vld [vmem:[#allocation2 + $0x20] sm:$0xff]
        %v276 = vld [vmem:[#allocation2 + $0x28] sm:$0xff]
        %v277 = vld [vmem:[#allocation2 + $0x30] sm:$0xff]
        %v278 = vld [vmem:[#allocation2 + $0x38] sm:$0xff]
        %v279 = vld [vmem:[#allocation2 + $0x40] sm:$0xff]
        %v280 = vld [vmem:[#allocation2 + $0x48] sm:$0xff]
        %v281 = vld [vmem:[#allocation2 + $0x50] sm:$0xff]
        %v282 = vld [vmem:[#allocation2 + $0x58] sm:$0xff]
        %v283 = vld [vmem:[#allocation2 + $0x60] sm:$0xff]
        %v284 = vld [vmem:[#allocation2 + $0x68] sm:$0xff]
        %v285 = vld [vmem:[#allocation2 + $0x70] sm:$0xff]
        %v286 = vld [vmem:[#allocation2 + $0x78] sm:$0xff]
        %v287 = vld [vmem:[#allocation2 + $0x80] sm:$0xff]
        %v288 = vld [vmem:[#allocation2 + $0x88] sm:$0xff]
        %v289 = vld [vmem:[#allocation2 + $0x90] sm:$0xff]
        %v290 = vld [vmem:[#allocation2 + $0x98] sm:$0xff]
        %v291 = vld [vmem:[#allocation2 + $0xa0] sm:$0xff]
        %v292 = vld [vmem:[#allocation2 + $0xa8] sm:$0xff]
        %v293 = vld [vmem:[#allocation2 + $0xb0] sm:$0xff]
        %v294 = vld [vmem:[#allocation2 + $0xb8] sm:$0xff]
        %v295 = vld [vmem:[#allocation2 + $0xc0] sm:$0xff]
        %v296 = vld [vmem:[#allocation2 + $0xc8] sm:$0xff]
        %v297 = vld [vmem:[#allocation2 + $0xd0] sm:$0xff]
        %v298 = vld [vmem:[#allocation2 + $0xd8] sm:$0xff]
        %v299 = vld [vmem:[#allocation2 + $0xe0] sm:$0xff]
        %v300 = vld [vmem:[#allocation2 + $0xe8] sm:$0xff]
        %v301 = vld [vmem:[#allocation2 + $0xf0] sm:$0xff]
        %v302 = vld [vmem:[#allocation2 + $0xf8] sm:$0xff]
        %v303 = vld [vmem:[#allocation2 + $0x100] sm:$0xff]
        %v304 = vld [vmem:[#allocation2 + $0x108] sm:$0xff]
        %v305 = vld [vmem:[#allocation2 + $0x110] sm:$0xff]
        %v306 = vld [vmem:[#allocation2 + $0x118] sm:$0xff]
        %v307 = vld [vmem:[#allocation2 + $0x120] sm:$0xff]
        %v308 = vld [vmem:[#allocation2 + $0x128] sm:$0xff]
        %v309 = vld [vmem:[#allocation2 + $0x130] sm:$0xff]
        %v310 = vld [vmem:[#allocation2 + $0x138] sm:$0xff]
        %v311 = vld [vmem:[#allocation2 + $0x140] sm:$0xff]
        %v312 = vld [vmem:[#allocation2 + $0x148] sm:$0xff]
        %v313 = vld [vmem:[#allocation2 + $0x150] sm:$0xff]
        %v314 = vld [vmem:[#allocation2 + $0x158] sm:$0xff]
        %v315 = vld [vmem:[#allocation2 + $0x160] sm:$0xff]
        %v316 = vld [vmem:[#allocation2 + $0x168] sm:$0xff]
        %v317 = vld [vmem:[#allocation2 + $0x170] sm:$0xff]
        %v318 = vld [vmem:[#allocation2 + $0x178] sm:$0xff]
        %v319 = vld [vmem:[#allocation5] sm:$0xff]
        %v320 = vld [vmem:[#allocation5 + $0x8] sm:$0xff]
        %v321 = vld [vmem:[#allocation5 + $0x10] sm:$0xff]
        %v322 = vld [vmem:[#allocation5 + $0x18] sm:$0xff]
        %v323 = vld [vmem:[#allocation5 + $0x20] sm:$0xff]
        %v324 = vld [vmem:[#allocation5 + $0x28] sm:$0xff]
        %v325 = vld [vmem:[#allocation5 + $0x30] sm:$0xff]
        %v326 = vld [vmem:[#allocation5 + $0x38] sm:$0xff]
        %v327 = vld [vmem:[#allocation5 + $0x40] sm:$0xff]
        %v328 = vld [vmem:[#allocation5 + $0x48] sm:$0xff]
        %v329 = vld [vmem:[#allocation5 + $0x50] sm:$0xff]
        %v330 = vld [vmem:[#allocation5 + $0x58] sm:$0xff]
        %v331 = vld [vmem:[#allocation5 + $0x60] sm:$0xff]
        %v332 = vld [vmem:[#allocation5 + $0x68] sm:$0xff]
        %v333 = vld [vmem:[#allocation5 + $0x70] sm:$0xff]
        %v334 = vld [vmem:[#allocation5 + $0x78] sm:$0xff]
        %v335 = vld [vmem:[#allocation5 + $0x80] sm:$0xff]
        %v336 = vld [vmem:[#allocation5 + $0x88] sm:$0xff]
        %v337 = vld [vmem:[#allocation5 + $0x90] sm:$0xff]
        %v338 = vld [vmem:[#allocation5 + $0x98] sm:$0xff]
        %v339 = vld [vmem:[#allocation5 + $0xa0] sm:$0xff]
        %v340 = vld [vmem:[#allocation5 + $0xa8] sm:$0xff]
        %v341 = vld [vmem:[#allocation5 + $0xb0] sm:$0xff]
        %v342 = vld [vmem:[#allocation5 + $0xb8] sm:$0xff]
        %v343 = vld [vmem:[#allocation5 + $0xc0] sm:$0xff]
        %v344 = vld [vmem:[#allocation5 + $0xc8] sm:$0xff]
        %v345 = vld [vmem:[#allocation5 + $0xd0] sm:$0xff]
        %v346 = vld [vmem:[#allocation5 + $0xd8] sm:$0xff]
        %v347 = vld [vmem:[#allocation5 + $0xe0] sm:$0xff]
        %v348 = vld [vmem:[#allocation5 + $0xe8] sm:$0xff]
        %v349 = vld [vmem:[#allocation5 + $0xf0] sm:$0xff]
        %v350 = vld [vmem:[#allocation5 + $0xf8] sm:$0xff]
        %v351 = vld [vmem:[#allocation5 + $0x100] sm:$0xff]
        %v352 = vld [vmem:[#allocation5 + $0x108] sm:$0xff]
        %v353 = vld [vmem:[#allocation5 + $0x110] sm:$0xff]
        %v354 = vld [vmem:[#allocation5 + $0x118] sm:$0xff]
        %v355 = vld [vmem:[#allocation5 + $0x120] sm:$0xff]
        %v356 = vld [vmem:[#allocation5 + $0x128] sm:$0xff]
        %v357 = vld [vmem:[#allocation5 + $0x130] sm:$0xff]
        %v358 = vld [vmem:[#allocation5 + $0x138] sm:$0xff]
        %v359 = vld [vmem:[#allocation5 + $0x140] sm:$0xff]
        %v360 = vld [vmem:[#allocation5 + $0x148] sm:$0xff]
        %v361 = vld [vmem:[#allocation5 + $0x150] sm:$0xff]
        %v362 = vld [vmem:[#allocation5 + $0x158] sm:$0xff]
        %v363 = vld [vmem:[#allocation5 + $0x160] sm:$0xff]
        %v364 = vld [vmem:[#allocation5 + $0x168] sm:$0xff]
        %v365 = vld [vmem:[#allocation5 + $0x170] sm:$0xff]
        %v366 = vld [vmem:[#allocation5 + $0x178] sm:$0xff]
        %v415 = vunpack.c.l.b16 %v319
        %v416 = vunpack.c.h.b16 %v319
        %v417 = vunpack.c.l.b16 %v320
        %v418 = vunpack.c.h.b16 %v320
        %v419 = vunpack.c.l.b16 %v321
        %v420 = vunpack.c.h.b16 %v321
        %v421 = vunpack.c.l.b16 %v322
        %v422 = vunpack.c.h.b16 %v322
        %v423 = vunpack.c.l.b16 %v323
        %v424 = vunpack.c.h.b16 %v323
        %v425 = vunpack.c.l.b16 %v324
        %v426 = vunpack.c.h.b16 %v324
        %v427 = vunpack.c.l.b16 %v325
        %v428 = vunpack.c.h.b16 %v325
        %v429 = vunpack.c.l.b16 %v326
        %v430 = vunpack.c.h.b16 %v326
        %v431 = vunpack.c.l.b16 %v327
        %v432 = vunpack.c.h.b16 %v327
        %v433 = vunpack.c.l.b16 %v328
        %v434 = vunpack.c.h.b16 %v328
        %v435 = vunpack.c.l.b16 %v329
        %v436 = vunpack.c.h.b16 %v329
        %v437 = vunpack.c.l.b16 %v330
        %v438 = vunpack.c.h.b16 %v330
        %v439 = vunpack.c.l.b16 %v331
        %v440 = vunpack.c.h.b16 %v331
        %v441 = vunpack.c.l.b16 %v332
        %v442 = vunpack.c.h.b16 %v332
        %v443 = vunpack.c.l.b16 %v333
        %v444 = vunpack.c.h.b16 %v333
        %v445 = vunpack.c.l.b16 %v334
        %v446 = vunpack.c.h.b16 %v334
        %v447 = vunpack.c.l.b16 %v335
        %v448 = vunpack.c.h.b16 %v335
        %v449 = vunpack.c.l.b16 %v336
        %v450 = vunpack.c.h.b16 %v336
        %v451 = vunpack.c.l.b16 %v337
        %v452 = vunpack.c.h.b16 %v337
        %v453 = vunpack.c.l.b16 %v338
        %v454 = vunpack.c.h.b16 %v338
        %v455 = vunpack.c.l.b16 %v339
        %v456 = vunpack.c.h.b16 %v339
        %v457 = vunpack.c.l.b16 %v340
        %v458 = vunpack.c.h.b16 %v340
        %v459 = vunpack.c.l.b16 %v341
        %v460 = vunpack.c.h.b16 %v341
        %v461 = vunpack.c.l.b16 %v342
        %v462 = vunpack.c.h.b16 %v342
        %v463 = vunpack.c.l.b16 %v343
        %v464 = vunpack.c.h.b16 %v343
        %v465 = vunpack.c.l.b16 %v344
        %v466 = vunpack.c.h.b16 %v344
        %v467 = vunpack.c.l.b16 %v345
        %v468 = vunpack.c.h.b16 %v345
        %v469 = vunpack.c.l.b16 %v346
        %v470 = vunpack.c.h.b16 %v346
        %v471 = vunpack.c.l.b16 %v347
        %v472 = vunpack.c.h.b16 %v347
        %v473 = vunpack.c.l.b16 %v348
        %v474 = vunpack.c.h.b16 %v348
        %v475 = vunpack.c.l.b16 %v349
        %v476 = vunpack.c.h.b16 %v349
        %v477 = vunpack.c.l.b16 %v350
        %v478 = vunpack.c.h.b16 %v350
        %v479 = vunpack.c.l.b16 %v351
        %v480 = vunpack.c.h.b16 %v351
        %v481 = vunpack.c.l.b16 %v352
        %v482 = vunpack.c.h.b16 %v352
        %v483 = vunpack.c.l.b16 %v353
        %v484 = vunpack.c.h.b16 %v353
        %v485 = vunpack.c.l.b16 %v354
        %v486 = vunpack.c.h.b16 %v354
        %v487 = vunpack.c.l.b16 %v355
        %v488 = vunpack.c.h.b16 %v355
        %v489 = vunpack.c.l.b16 %v356
        %v490 = vunpack.c.h.b16 %v356
        %v491 = vunpack.c.l.b16 %v357
        %v492 = vunpack.c.h.b16 %v357
        %v493 = vunpack.c.l.b16 %v358
        %v494 = vunpack.c.h.b16 %v358
        %v495 = vunpack.c.l.b16 %v359
        %v496 = vunpack.c.h.b16 %v359
        %v497 = vunpack.c.l.b16 %v360
        %v498 = vunpack.c.h.b16 %v360
        %v499 = vunpack.c.l.b16 %v361
        %v500 = vunpack.c.h.b16 %v361
        %v501 = vunpack.c.l.b16 %v362
        %v502 = vunpack.c.h.b16 %v362
        %v503 = vunpack.c.l.b16 %v363
        %v504 = vunpack.c.h.b16 %v363
        %v505 = vunpack.c.l.b16 %v364
        %v506 = vunpack.c.h.b16 %v364
        %v507 = vunpack.c.l.b16 %v365
        %v508 = vunpack.c.h.b16 %v365
        %v509 = vunpack.c.l.b16 %v366
        %v510 = vunpack.c.h.b16 %v366
        %v511 = vpack.c.b16 %v417, %v415
        %v512 = vpack.c.b16 %v418, %v416
        %v513 = vpack.c.b16 %v421, %v419
        %v514 = vpack.c.b16 %v422, %v420
        %v515 = vpack.c.b16 %v425, %v423
        %v516 = vpack.c.b16 %v426, %v424
        %v517 = vpack.c.b16 %v429, %v427
        %v518 = vpack.c.b16 %v430, %v428
        %v519 = vpack.c.b16 %v433, %v431
        %v520 = vpack.c.b16 %v434, %v432
        %v521 = vpack.c.b16 %v437, %v435
        %v522 = vpack.c.b16 %v438, %v436
        %v523 = vpack.c.b16 %v441, %v439
        %v524 = vpack.c.b16 %v442, %v440
        %v525 = vpack.c.b16 %v445, %v443
        %v526 = vpack.c.b16 %v446, %v444
        %v527 = vpack.c.b16 %v449, %v447
        %v528 = vpack.c.b16 %v450, %v448
        %v529 = vpack.c.b16 %v453, %v451
        %v530 = vpack.c.b16 %v454, %v452
        %v531 = vpack.c.b16 %v457, %v455
        %v532 = vpack.c.b16 %v458, %v456
        %v533 = vpack.c.b16 %v461, %v459
        %v534 = vpack.c.b16 %v462, %v460
        %v535 = vpack.c.b16 %v465, %v463
        %v536 = vpack.c.b16 %v466, %v464
        %v537 = vpack.c.b16 %v469, %v467
        %v538 = vpack.c.b16 %v470, %v468
        %v539 = vpack.c.b16 %v473, %v471
        %v540 = vpack.c.b16 %v474, %v472
        %v541 = vpack.c.b16 %v477, %v475
        %v542 = vpack.c.b16 %v478, %v476
        %v543 = vpack.c.b16 %v481, %v479
        %v544 = vpack.c.b16 %v482, %v480
        %v545 = vpack.c.b16 %v485, %v483
        %v546 = vpack.c.b16 %v486, %v484
        %v547 = vpack.c.b16 %v489, %v487
        %v548 = vpack.c.b16 %v490, %v488
        %v549 = vpack.c.b16 %v493, %v491
        %v550 = vpack.c.b16 %v494, %v492
        %v551 = vpack.c.b16 %v497, %v495
        %v552 = vpack.c.b16 %v498, %v496
        %v553 = vpack.c.b16 %v501, %v499
        %v554 = vpack.c.b16 %v502, %v500
        %v555 = vpack.c.b16 %v505, %v503
        %v556 = vpack.c.b16 %v506, %v504
        %v557 = vpack.c.b16 %v509, %v507
        %v558 = vpack.c.b16 %v510, %v508
        %607 = vmatprep.subr.bf16.mxu0 %v526
        %608 = vmatpush1.bf16.msra.mxu0 %v525
        %609 = vmatprep.subr.bf16.mxu0 %v524
        %610 = vmatpush1.bf16.msra.mxu0 %v523
        %611 = vmatprep.subr.bf16.mxu0 %v522
        %612 = vmatpush1.bf16.msra.mxu0 %v521
        %613 = vmatprep.subr.bf16.mxu0 %v520
        %614 = vmatpush1.bf16.msra.mxu0 %v519
        %615 = vmatprep.subr.bf16.mxu0 %v518
        %616 = vmatpush1.bf16.msra.mxu0 %v517
        %617 = vmatprep.subr.bf16.mxu0 %v516
        %618 = vmatpush1.bf16.msra.mxu0 %v515
        %619 = vmatprep.subr.bf16.mxu0 %v514
        %620 = vmatpush1.bf16.msra.mxu0 %v513
        %621 = vmatprep.subr.bf16.mxu0 %v512
        %622 = vmatpush1.bf16.msra.mxu0 %v511
        %623 = vmatprep.subr.bf16.mxu0 %v542
        %624 = vmatpush2.bf16.msra.mxu0 %v541
        %625 = vmatprep.subr.bf16.mxu0 %v540
        %626 = vmatpush2.bf16.msra.mxu0 %v539
        %627 = vmatprep.subr.bf16.mxu0 %v538
        %628 = vmatpush2.bf16.msra.mxu0 %v537
        %629 = vmatprep.subr.bf16.mxu0 %v536
        %630 = vmatpush2.bf16.msra.mxu0 %v535
        %631 = vmatprep.subr.bf16.mxu0 %v534
        %632 = vmatpush2.bf16.msra.mxu0 %v533
        %633 = vmatprep.subr.bf16.mxu0 %v532
        %634 = vmatpush2.bf16.msra.mxu0 %v531
        %635 = vmatprep.subr.bf16.mxu0 %v530
        %636 = vmatpush2.bf16.msra.mxu0 %v529
        %637 = vmatprep.subr.bf16.mxu0 %v528
        %638 = vmatpush2.bf16.msra.mxu0 %v527
        %639 = vmatprep.mubr.bf16.mxu0 %v269
        %640 = vmatmul.mubr.bf16.gmra.mxu0 %v268
        %v641 = vpop.f32.mrf.mxu0
        %v642 = vadd.f32 0.0, %v641
        %v643 = vpop.f32.mrf.mxu0
        %v644 = vadd.f32 0.0, %v643
        %v645 = vpop.f32.mrf.mxu0
        %v646 = vpop.f32.mrf.mxu0
        %647 = vdwg.mxu0
        %648 = vmatprep.subr.bf16.mxu0 %v558
        %649 = vmatpush1.bf16.msra.mxu0 %v557
        %650 = vmatprep.subr.bf16.mxu0 %v556
        %651 = vmatpush1.bf16.msra.mxu0 %v555
        %652 = vmatprep.subr.bf16.mxu0 %v554
        %653 = vmatpush1.bf16.msra.mxu0 %v553
        %654 = vmatprep.subr.bf16.mxu0 %v552
        %655 = vmatpush1.bf16.msra.mxu0 %v551
        %656 = vmatprep.subr.bf16.mxu0 %v550
        %657 = vmatpush1.bf16.msra.mxu0 %v549
        %658 = vmatprep.subr.bf16.mxu0 %v548
        %659 = vmatpush1.bf16.msra.mxu0 %v547
        %660 = vmatprep.subr.bf16.mxu0 %v546
        %661 = vmatpush1.bf16.msra.mxu0 %v545
        %662 = vmatprep.subr.bf16.mxu0 %v544
        %663 = vmatpush1.bf16.msra.mxu0 %v543
        %664 = vmatprep.subr.bf16.mxu0 0
        %665 = vmatpush2.bf16.msra.mxu0 0
        %666 = vmatprep.subr.bf16.mxu0 0
        %667 = vmatpush2.bf16.msra.mxu0 0
        %668 = vmatprep.subr.bf16.mxu0 0
        %669 = vmatpush2.bf16.msra.mxu0 0
        %670 = vmatprep.subr.bf16.mxu0 0
        %671 = vmatpush2.bf16.msra.mxu0 0
        %672 = vmatprep.subr.bf16.mxu0 0
        %673 = vmatpush2.bf16.msra.mxu0 0
        %674 = vmatprep.subr.bf16.mxu0 0
        %675 = vmatpush2.bf16.msra.mxu0 0
        %676 = vmatprep.subr.bf16.mxu0 0
        %677 = vmatpush2.bf16.msra.mxu0 0
        %678 = vmatprep.subr.bf16.mxu0 0
        %679 = vmatpush2.bf16.msra.mxu0 0
        %680 = vmatprep.mubr.bf16.mxu0 0
        %681 = vmatmul.mubr.bf16.gmra.mxu0 %v270
        %v682 = vpop.f32.mrf.mxu0
        %v683 = vadd.f32 %v642, %v682
        %v684 = vpop.f32.mrf.mxu0
        %v685 = vadd.f32 %v644, %v684
        %v686 = vpop.f32.mrf.mxu0
        %v687 = vpop.f32.mrf.mxu0
        %688 = vdwg.mxu0
        %v737 = vunpack.c.l.b16 %v271
        %v738 = vunpack.c.h.b16 %v271
        %v739 = vunpack.c.l.b16 %v272
        %v740 = vunpack.c.h.b16 %v272
        %v741 = vunpack.c.l.b16 %v273
        %v742 = vunpack.c.h.b16 %v273
        %v743 = vunpack.c.l.b16 %v274
        %v744 = vunpack.c.h.b16 %v274
        %v745 = vunpack.c.l.b16 %v275
        %v746 = vunpack.c.h.b16 %v275
        %v747 = vunpack.c.l.b16 %v276
        %v748 = vunpack.c.h.b16 %v276
        %v749 = vunpack.c.l.b16 %v277
        %v750 = vunpack.c.h.b16 %v277
        %v751 = vunpack.c.l.b16 %v278
        %v752 = vunpack.c.h.b16 %v278
        %v753 = vunpack.c.l.b16 %v279
        %v754 = vunpack.c.h.b16 %v279
        %v755 = vunpack.c.l.b16 %v280
        %v756 = vunpack.c.h.b16 %v280
        %v757 = vunpack.c.l.b16 %v281
        %v758 = vunpack.c.h.b16 %v281
        %v759 = vunpack.c.l.b16 %v282
        %v760 = vunpack.c.h.b16 %v282
        %v761 = vunpack.c.l.b16 %v283
        %v762 = vunpack.c.h.b16 %v283
        %v763 = vunpack.c.l.b16 %v284
        %v764 = vunpack.c.h.b16 %v284
        %v765 = vunpack.c.l.b16 %v285
        %v766 = vunpack.c.h.b16 %v285
        %v767 = vunpack.c.l.b16 %v286
        %v768 = vunpack.c.h.b16 %v286
        %v769 = vunpack.c.l.b16 %v287
        %v770 = vunpack.c.h.b16 %v287
        %v771 = vunpack.c.l.b16 %v288
        %v772 = vunpack.c.h.b16 %v288
        %v773 = vunpack.c.l.b16 %v289
        %v774 = vunpack.c.h.b16 %v289
        %v775 = vunpack.c.l.b16 %v290
        %v776 = vunpack.c.h.b16 %v290
        %v777 = vunpack.c.l.b16 %v291
        %v778 = vunpack.c.h.b16 %v291
        %v779 = vunpack.c.l.b16 %v292
        %v780 = vunpack.c.h.b16 %v292
        %v781 = vunpack.c.l.b16 %v293
        %v782 = vunpack.c.h.b16 %v293
        %v783 = vunpack.c.l.b16 %v294
        %v784 = vunpack.c.h.b16 %v294
        %v785 = vunpack.c.l.b16 %v295
        %v786 = vunpack.c.h.b16 %v295
        %v787 = vunpack.c.l.b16 %v296
        %v788 = vunpack.c.h.b16 %v296
        %v789 = vunpack.c.l.b16 %v297
        %v790 = vunpack.c.h.b16 %v297
        %v791 = vunpack.c.l.b16 %v298
        %v792 = vunpack.c.h.b16 %v298
        %v793 = vunpack.c.l.b16 %v299
        %v794 = vunpack.c.h.b16 %v299
        %v795 = vunpack.c.l.b16 %v300
        %v796 = vunpack.c.h.b16 %v300
        %v797 = vunpack.c.l.b16 %v301
        %v798 = vunpack.c.h.b16 %v301
        %v799 = vunpack.c.l.b16 %v302
        %v800 = vunpack.c.h.b16 %v302
        %v801 = vunpack.c.l.b16 %v303
        %v802 = vunpack.c.h.b16 %v303
        %v803 = vunpack.c.l.b16 %v304
        %v804 = vunpack.c.h.b16 %v304
        %v805 = vunpack.c.l.b16 %v305
        %v806 = vunpack.c.h.b16 %v305
        %v807 = vunpack.c.l.b16 %v306
        %v808 = vunpack.c.h.b16 %v306
        %v809 = vunpack.c.l.b16 %v307
        %v810 = vunpack.c.h.b16 %v307
        %v811 = vunpack.c.l.b16 %v308
        %v812 = vunpack.c.h.b16 %v308
        %v813 = vunpack.c.l.b16 %v309
        %v814 = vunpack.c.h.b16 %v309
        %v815 = vunpack.c.l.b16 %v310
        %v816 = vunpack.c.h.b16 %v310
        %v817 = vunpack.c.l.b16 %v311
        %v818 = vunpack.c.h.b16 %v311
        %v819 = vunpack.c.l.b16 %v312
        %v820 = vunpack.c.h.b16 %v312
        %v821 = vunpack.c.l.b16 %v313
        %v822 = vunpack.c.h.b16 %v313
        %v823 = vunpack.c.l.b16 %v314
        %v824 = vunpack.c.h.b16 %v314
        %v825 = vunpack.c.l.b16 %v315
        %v826 = vunpack.c.h.b16 %v315
        %v827 = vunpack.c.l.b16 %v316
        %v828 = vunpack.c.h.b16 %v316
        %v829 = vunpack.c.l.b16 %v317
        %v830 = vunpack.c.h.b16 %v317
        %v831 = vunpack.c.l.b16 %v318
        %v832 = vunpack.c.h.b16 %v318
        %v833 = vpack.c.b16 %v739, %v737
        %v834 = vpack.c.b16 %v740, %v738
        %v835 = vpack.c.b16 %v743, %v741
        %v836 = vpack.c.b16 %v744, %v742
        %v837 = vpack.c.b16 %v747, %v745
        %v838 = vpack.c.b16 %v748, %v746
        %v839 = vpack.c.b16 %v751, %v749
        %v840 = vpack.c.b16 %v752, %v750
        %v841 = vpack.c.b16 %v755, %v753
        %v842 = vpack.c.b16 %v756, %v754
        %v843 = vpack.c.b16 %v759, %v757
        %v844 = vpack.c.b16 %v760, %v758
        %v845 = vpack.c.b16 %v763, %v761
        %v846 = vpack.c.b16 %v764, %v762
        %v847 = vpack.c.b16 %v767, %v765
        %v848 = vpack.c.b16 %v768, %v766
        %v849 = vpack.c.b16 %v771, %v769
        %v850 = vpack.c.b16 %v772, %v770
        %v851 = vpack.c.b16 %v775, %v773
        %v852 = vpack.c.b16 %v776, %v774
        %v853 = vpack.c.b16 %v779, %v777
        %v854 = vpack.c.b16 %v780, %v778
        %v855 = vpack.c.b16 %v783, %v781
        %v856 = vpack.c.b16 %v784, %v782
        %v857 = vpack.c.b16 %v787, %v785
        %v858 = vpack.c.b16 %v788, %v786
        %v859 = vpack.c.b16 %v791, %v789
        %v860 = vpack.c.b16 %v792, %v790
        %v861 = vpack.c.b16 %v795, %v793
        %v862 = vpack.c.b16 %v796, %v794
        %v863 = vpack.c.b16 %v799, %v797
        %v864 = vpack.c.b16 %v800, %v798
        %v865 = vpack.c.b16 %v803, %v801
        %v866 = vpack.c.b16 %v804, %v802
        %v867 = vpack.c.b16 %v807, %v805
        %v868 = vpack.c.b16 %v808, %v806
        %v869 = vpack.c.b16 %v811, %v809
        %v870 = vpack.c.b16 %v812, %v810
        %v871 = vpack.c.b16 %v815, %v813
        %v872 = vpack.c.b16 %v816, %v814
        %v873 = vpack.c.b16 %v819, %v817
        %v874 = vpack.c.b16 %v820, %v818
        %v875 = vpack.c.b16 %v823, %v821
        %v876 = vpack.c.b16 %v824, %v822
        %v877 = vpack.c.b16 %v827, %v825
        %v878 = vpack.c.b16 %v828, %v826
        %v879 = vpack.c.b16 %v831, %v829
        %v880 = vpack.c.b16 %v832, %v830
        %929 = vmatprep.subr.bf16.mxu0 %v848
        %930 = vmatpush1.bf16.msra.mxu0 %v847
        %931 = vmatprep.subr.bf16.mxu0 %v846
        %932 = vmatpush1.bf16.msra.mxu0 %v845
        %933 = vmatprep.subr.bf16.mxu0 %v844
        %934 = vmatpush1.bf16.msra.mxu0 %v843
        %935 = vmatprep.subr.bf16.mxu0 %v842
        %936 = vmatpush1.bf16.msra.mxu0 %v841
        %937 = vmatprep.subr.bf16.mxu0 %v840
        %938 = vmatpush1.bf16.msra.mxu0 %v839
        %939 = vmatprep.subr.bf16.mxu0 %v838
        %940 = vmatpush1.bf16.msra.mxu0 %v837
        %941 = vmatprep.subr.bf16.mxu0 %v836
        %942 = vmatpush1.bf16.msra.mxu0 %v835
        %943 = vmatprep.subr.bf16.mxu0 %v834
        %944 = vmatpush1.bf16.msra.mxu0 %v833
        %945 = vmatprep.subr.bf16.mxu0 %v864
        %946 = vmatpush2.bf16.msra.mxu0 %v863
        %947 = vmatprep.subr.bf16.mxu0 %v862
        %948 = vmatpush2.bf16.msra.mxu0 %v861
        %949 = vmatprep.subr.bf16.mxu0 %v860
        %950 = vmatpush2.bf16.msra.mxu0 %v859
        %951 = vmatprep.subr.bf16.mxu0 %v858
        %952 = vmatpush2.bf16.msra.mxu0 %v857
        %953 = vmatprep.subr.bf16.mxu0 %v856
        %954 = vmatpush2.bf16.msra.mxu0 %v855
        %955 = vmatprep.subr.bf16.mxu0 %v854
        %956 = vmatpush2.bf16.msra.mxu0 %v853
        %957 = vmatprep.subr.bf16.mxu0 %v852
        %958 = vmatpush2.bf16.msra.mxu0 %v851
        %959 = vmatprep.subr.bf16.mxu0 %v850
        %960 = vmatpush2.bf16.msra.mxu0 %v849
        %961 = vmatprep.mubr.bf16.mxu0 %v269
        %962 = vmatmul.mubr.bf16.gmra.mxu0 %v268
        %v963 = vpop.f32.mrf.mxu0
        %v964 = vadd.f32 %v683, %v963
        %v965 = vpop.f32.mrf.mxu0
        %v966 = vadd.f32 %v685, %v965
        %v967 = vpop.f32.mrf.mxu0
        %v968 = vpop.f32.mrf.mxu0
        %969 = vdwg.mxu0
        %970 = vmatprep.subr.bf16.mxu0 %v880
        %971 = vmatpush1.bf16.msra.mxu0 %v879
        %972 = vmatprep.subr.bf16.mxu0 %v878
        %973 = vmatpush1.bf16.msra.mxu0 %v877
        %974 = vmatprep.subr.bf16.mxu0 %v876
        %975 = vmatpush1.bf16.msra.mxu0 %v875
        %976 = vmatprep.subr.bf16.mxu0 %v874
        %977 = vmatpush1.bf16.msra.mxu0 %v873
        %978 = vmatprep.subr.bf16.mxu0 %v872
        %979 = vmatpush1.bf16.msra.mxu0 %v871
        %980 = vmatprep.subr.bf16.mxu0 %v870
        %981 = vmatpush1.bf16.msra.mxu0 %v869
        %982 = vmatprep.subr.bf16.mxu0 %v868
        %983 = vmatpush1.bf16.msra.mxu0 %v867
        %984 = vmatprep.subr.bf16.mxu0 %v866
        %985 = vmatpush1.bf16.msra.mxu0 %v865
        %986 = vmatprep.subr.bf16.mxu0 0
        %987 = vmatpush2.bf16.msra.mxu0 0
        %988 = vmatprep.subr.bf16.mxu0 0
        %989 = vmatpush2.bf16.msra.mxu0 0
        %990 = vmatprep.subr.bf16.mxu0 0
        %991 = vmatpush2.bf16.msra.mxu0 0
        %992 = vmatprep.subr.bf16.mxu0 0
        %993 = vmatpush2.bf16.msra.mxu0 0
        %994 = vmatprep.subr.bf16.mxu0 0
        %995 = vmatpush2.bf16.msra.mxu0 0
        %996 = vmatprep.subr.bf16.mxu0 0
        %997 = vmatpush2.bf16.msra.mxu0 0
        %998 = vmatprep.subr.bf16.mxu0 0
        %999 = vmatpush2.bf16.msra.mxu0 0
        %1000 = vmatprep.subr.bf16.mxu0 0
        %1001 = vmatpush2.bf16.msra.mxu0 0
        %1002 = vmatprep.mubr.bf16.mxu0 0
        %1003 = vmatmul.mubr.bf16.gmra.mxu0 %v270
        %v1004 = vpop.f32.mrf.mxu0
        %v1005 = vadd.f32 %v964, %v1004
        %v1006 = vpop.f32.mrf.mxu0
        %v1007 = vadd.f32 %v966, %v1006
        %v1008 = vpop.f32.mrf.mxu0
        %v1009 = vpop.f32.mrf.mxu0
        %1010 = vdwg.mxu0
        %1011 = vst [vmem:[%s191] sm:$0xff] %v1005
        %1012 = vst [vmem:[%s191 + $0x8] sm:$0xff] %v1007
        %s1013 = sand.u32 %s95, 1
        %s1014 = scalar_lea.sflag [#allocation4], %s1013
        %s1015 = sand.u32 %s95, 1
        %s1016 = smul.addr %s1015, 16
        %s1017 = scalar_lea.vmem [#allocation7], %s1016
        // Predicated region
        $region41: #{tpu_custom_call.1} parent=31 // pred_check
          %p1018 = pneg %p105
        $region42: #{tpu_custom_call.1} parent=31 // pred_check_branch
          %1020 = sbr.rel (%p1018) target = $region44
        $region43: #{tpu_custom_call.1} parent=31 // pred_region
          %s1022 = ssub.s32 256, 256
          %1023 = vsyncadd %s1014, %s1022
          %s1024 = smul.addr %s19, 2
          %s1025 = smul.addr %s1024, 128
          %s1026 = scalar_lea.hbm %s3, %s1025
          %s1028 = sshll.u32 %s1017, 4
          %s1029 = int_to_ptr.vmem [resolvable:$true] %s1028
          %1031 = dma.vmem_to_hbm [thread:$0]  %s1029, 256, %s1026, %s1014
        $region44: #{tpu_custom_call.1} parent=31 // pred_fallthru
          _
      $region32: #{tpu_custom_call.1} parent=5 // pred_fallthru
        _
      %p1032 = scmp.le.s32.totalorder 2, %s14
      // Predicated region
      $region45: #{tpu_custom_call.1} parent=5 // pred_check
        %p1033 = pneg %p1032
      $region46: #{tpu_custom_call.1} parent=5 // pred_check_branch
        %1035 = sbr.rel (%p1033) target = $region48
      $region47: #{tpu_custom_call.1} parent=5 // pred_region
        %s1036 = ssub.s32 %s14, 2
        // Predicated region
        $region49: #{tpu_custom_call.1} parent=47 // pred_check
          %p1037 = pneg %p111
        $region50: #{tpu_custom_call.1} parent=47 // pred_check_branch
          %1039 = sbr.rel (%p1037) target = $region52
        $region51: #{tpu_custom_call.1} parent=47 // pred_region
          %s1040 = sand.u32 %s96, 1
          %s1041 = scalar_lea.sflag [#allocation4], %s1040
          %s1042 = sand.u32 %s96, 1
          %s1043 = smul.addr %s1042, 16
          %s1044 = scalar_lea.vmem [#allocation7], %s1043
          %1045 = dma.done %s1041, 256
        $region52: #{tpu_custom_call.1} parent=47 // pred_fallthru
          _
      $region48: #{tpu_custom_call.1} parent=5 // pred_fallthru
        _
    $region6: #{tpu_custom_call.1} parent=1 // loop_footer
      %s18 = sadd.s32 1, %s14
    $region7: #{tpu_custom_call.1} parent=1 // loop_footer_branch
      %13 = sbr.rel target = $region3
    $region8: #{tpu_custom_call.1} parent=1 // loop_exit
      _
    %1046 = vsyncpa [#allocation3], 1
    %s1047 = scalar_lea.sflag [#allocation3], 1
    %1048 = vsyncpa %s1047, 1
    %1049 = vsyncpa [#allocation6], 1
    %1050 = vsyncpa [#allocation4], 1
    %s1051 = scalar_lea.sflag [#allocation4], 1
    %1052 = vsyncpa %s1051, 1

</llo_original>
